<compile_context>
chip_gen: v5e
topology: v5e:2x2
jax: 0.10.0
libtpu: 0.0.40
codegen_flags: <defaults>
</compile_context>

<pallas_src>
import jax
import jax.numpy as jnp
from jax.experimental import pallas as pl
from jax.experimental.pallas import tpu as pltpu


# --------------------------------------------------------------------------- #
# Kernels
# --------------------------------------------------------------------------- #
def _fc2(v, w2_ref, b2_ref, o_ref):
    """Final projection of a (bt, F) tile.

    For output_size == 1 an (F, 1) MXU matmul uses 1/128 (v5e) or 1/256
    (v6e/v7x) of the lanes, so w2 is stored as a (1, F) row and the product is
    done on the VPU + a cross-lane (XLU) reduce in f32, freeing the MXU slot.
    """
    if o_ref.shape[-1] == 1:
        acc = jnp.sum(v.astype(jnp.float32) * w2_ref[...], axis=-1, keepdims=True)
        o_ref[...] = (acc + b2_ref[...]).astype(o_ref.dtype)
    else:
        o_ref[...] = (jnp.dot(v.astype(w2_ref.dtype), w2_ref[...],
                              preferred_element_type=jnp.float32)
                      + b2_ref[...]).astype(o_ref.dtype)


def gate_a_kernel(x_ref, w1_ref, b1_ref, wv_ref, bv_ref, w2_ref, b2_ref, o_ref):
    # In-kernel cast of the MXU operand (no extra HBM traffic; no-op for f32).
    x = x_ref[...].astype(w1_ref.dtype)
    # fc1: (bt, D) @ (D, H), f32 accumulate; bias add in f32.
    h = jnp.dot(x, w1_ref[...], preferred_element_type=jnp.float32) + b1_ref[...]
    # SelfAttention with seq_len == 1: softmax over the singleton axis is
    # exactly 1.0, so the attention output equals the value projection.
    v = jnp.dot(h.astype(wv_ref.dtype), wv_ref[...],
                preferred_element_type=jnp.float32) + bv_ref[...]
    _fc2(v, w2_ref, b2_ref, o_ref)


def gate_a_fused_kernel(x_ref, w1v_ref, b1v_ref, w2_ref, b2_ref, o_ref):
    # Wv folded into W1 on the host: v = x @ (W1.Wv) + (b1.Wv + bv).
    v = jnp.dot(x_ref[...].astype(w1v_ref.dtype), w1v_ref[...],
                preferred_element_type=jnp.float32) + b1v_ref[...]
    _fc2(v, w2_ref, b2_ref, o_ref)


def gate_a_affine_kernel(x_ref, w_ref, b_ref, o_ref):
    # Fully folded module: GateA(x) == x @ (W1.Wv.W2) + (b1.Wv.W2 + bv.W2 + b2).
    # For O == 1 this is a VPU multiply + lane reduce; x is read exactly once.
    _fc2(x_ref[...], w_ref, b_ref, o_ref)


# --------------------------------------------------------------------------- #
# Host-side preparation (folds + weight casts, done once per parameter set)
# --------------------------------------------------------------------------- #
def prepare_gate_a(params, *, use_bf16=False, fuse_wv=False, fuse_all=False):
    w1, b1 = params["w1"], params["b1"]
    wv, bv = params["wv"], params["bv"]
    w2, b2 = params["w2"], params["b2"]
    D, H = w1.shape
    O = w2.shape[1]
    wdt = jnp.bfloat16 if use_bf16 else jnp.float32
    hi = jax.lax.Precision.HIGHEST

    if fuse_all:
        w1v = jnp.dot(w1, wv, precision=hi)                    # (D, H)
        b1v = jnp.dot(b1, wv, precision=hi) + bv               # (1, H)
        w_all = jnp.dot(w1v, w2, precision=hi)                 # (D, O)
        b_all = jnp.dot(b1v, w2, precision=hi) + b2            # (1, O)
        if O == 1:
            ops = (w_all.T.astype(jnp.float32), b_all.astype(jnp.float32))
        else:
            ops = (w_all.astype(wdt), b_all.astype(jnp.float32))
        return dict(kernel=gate_a_affine_kernel, weights=ops, dims=(D, H, O))

    # fc2 layout: (1, H) f32 row for the VPU path (O == 1), else (H, O) f32.
    w2p = (w2.T if O == 1 else w2).astype(jnp.float32)
    b2p = b2.astype(jnp.float32)

    if fuse_wv:
        w1v = jnp.dot(w1, wv, precision=hi)
        b1v = jnp.dot(b1, wv, precision=hi) + bv
        ops = (w1v.astype(wdt), b1v.astype(jnp.float32), w2p, b2p)
        return dict(kernel=gate_a_fused_kernel, weights=ops, dims=(D, H, O))

    ops = (w1.astype(wdt), b1.astype(jnp.float32),
           wv.astype(wdt), bv.astype(jnp.float32), w2p, b2p)
    return dict(kernel=gate_a_kernel, weights=ops, dims=(D, H, O))


# --------------------------------------------------------------------------- #
# Wrapper
# --------------------------------------------------------------------------- #
def _round_up(n, m):
    return ((n + m - 1) // m) * m


def _vmem_capacity_bytes():
    try:
        return int(pltpu.get_tpu_info().vmem_capacity_bytes)
    except Exception:
        return 64 << 20  # conservative (v7x per-TC physical VMEM)


def _const_spec(shape, single_buffer):
    idx = lambda i: (0,) * len(shape)
    if single_buffer:
        # Constant index_map -> weights stay resident; single-buffer them to
        # halve their VMEM footprint (matters most on v7x's 64 MiB VMEM).
        return pl.BlockSpec(shape, idx, pipeline_mode=pl.Buffered(1))
    return pl.BlockSpec(shape, idx)


def _pick_batch_tile(B, batch_tile, *, align, cap, fits):
    if batch_tile is not None:
        bt = _round_up(batch_tile, align)
    else:
        bt = min(_round_up(B, align), cap)
        while bt > align and not fits(bt):
            bt = max(align, _round_up(bt // 2, align))
    return bt, _round_up(B, bt)


def gate_a_forward(x, prepared, *, batch_tile=None, single_buffer_weights=True):
    B, D = x.shape
    Dp, H, O = prepared["dims"]
    assert D == Dp, "input feature dim mismatch"
    kernel = prepared["kernel"]
    weights = prepared["weights"]

    vmem_cap = _vmem_capacity_bytes()
    budget = int(vmem_cap * 0.78)          # ~100 MiB on v5e/v6e, ~50 MiB on v7x
    hard = int(vmem_cap * 0.85)            # upper bound for vmem_limit_bytes
    cap = 2048 if vmem_cap >= (96 << 20) else 512

    x_item = jnp.dtype(x.dtype).itemsize
    any_bf16 = (x.dtype == jnp.bfloat16) or any(w.dtype == jnp.bfloat16 for w in weights)
    align = 32 if any_bf16 else 8          # bf16 packs rows along sublanes
    weight_bytes = sum(int(w.size) * jnp.dtype(w.dtype).itemsize for w in weights)

    def est(bt, weight_factor):
        return (2 * bt * D * x_item                 # double-buffered x tile
                + 2 * bt * max(O, 8) * 4            # double-buffered out tile
                + weight_factor * weight_bytes      # resident weights/biases
                + 4 * bt * H * 4                    # live f32 intermediates
                + (4 << 20))                        # headroom

    wf0 = 1 if single_buffer_weights else 2
    bt, B_pad = _pick_batch_tile(B, batch_tile, align=align, cap=cap,
                                 fits=lambda b: est(b, wf0) <= budget)

    # Pad awkward batch sizes up to a multiple of bt (output sliced back);
    # never fall back to one giant bt = B block.
    xp = x if B_pad == B else jnp.pad(x, ((0, B_pad - B), (0, 0)))
    grid = (B_pad // bt,)

    def run(single_buffer):
        weight_factor = 1 if single_buffer else 2
        in_specs = [pl.BlockSpec((bt, D), lambda i: (i, 0))]
        in_specs += [_const_spec(w.shape, single_buffer) for w in weights]
        out_spec = pl.BlockSpec((bt, O), lambda i: (i, 0))
        vmem_bytes = int(min(max(est(bt, weight_factor), 32 << 20), hard))
        return pl.pallas_call(
            kernel,
            out_shape=jax.ShapeDtypeStruct((B_pad, O), jnp.float32),
            grid_spec=pltpu.PrefetchScalarGridSpec(
                num_scalar_prefetch=0,
                grid=grid,
                in_specs=in_specs,
                out_specs=out_spec,
            ),
            compiler_params=pltpu.CompilerParams(
                dimension_semantics=(pltpu.PARALLEL,),
                vmem_limit_bytes=vmem_bytes),
        )(xp, *weights)

    if single_buffer_weights:
        try:
            out = jax.block_until_ready(run(True))
        except Exception:
            out = jax.block_until_ready(run(False))
    else:
        out = jax.block_until_ready(run(False))

    return out[:B] if B_pad != B else out


# --------------------------------------------------------------------------- #
# Params + pure-JAX reference (mirrors the PyTorch forward)
# --------------------------------------------------------------------------- #
def init_params(key, input_size, output_size):
    """Deterministic init. Linear weights are stored transposed: (in, out)."""
    H = input_size // 2

    def linear(key, fan_in, fan_out):
        kw, kb = jax.random.split(key)
        bound = 1.0 / jnp.sqrt(jnp.float32(fan_in))
        w = jax.random.uniform(kw, (fan_in, fan_out), jnp.float32, -bound, bound)
        b = jax.random.uniform(kb, (1, fan_out), jnp.float32, -bound, bound)
        return w, b

    k1, kq, kk, kv, k2 = jax.random.split(key, 5)
    w1, b1 = linear(k1, input_size, H)
    wq, bq = linear(kq, H, H)
    wk, bk = linear(kk, H, H)
    wv, bv = linear(kv, H, H)
    w2, b2 = linear(k2, H, output_size)
    return dict(w1=w1, b1=b1, wq=wq, bq=bq, wk=wk, bk=bk,
                wv=wv, bv=bv, w2=w2, b2=b2)


def gate_a_reference(x, p):
    """Pure-JAX reference mirroring the PyTorch forward (seq_len = 1)."""
    # TODO(synk): torch.squeeze(out) would also drop the batch dim when B == 1;
    # we follow the intended dim=1 squeeze (requires B >= 2).
    h = x @ p["w1"] + p["b1"]                    # fc1, (B, H)
    hq = h[:, None, :]                           # unsqueeze(1) -> (B, 1, H)
    q = hq @ p["wq"] + p["bq"]
    k = hq @ p["wk"] + p["bk"]
    v = hq @ p["wv"] + p["bv"]
    scale = 1.0 / jnp.sqrt(jnp.float32(q.shape[-1]))
    scores = jnp.einsum("bqd,bkd->bqk", q, k) * scale
    attn = jax.nn.softmax(scores, axis=-1)       # length-1 axis -> exactly 1.0
    out = jnp.einsum("bqk,bkd->bqd", attn, v)
    out = jnp.squeeze(out, axis=1)               # squeeze -> (B, H)
    return out @ p["w2"] + p["b2"]               # fc2, (B, O)


# --------------------------------------------------------------------------- #
if __name__ == "__main__":
    INPUT_SIZE = 32     # small stand-in for 768 (must be even)
    OUTPUT_SIZE = 1
    BATCH = 8

    key = jax.random.PRNGKey(0)
    kx, kp = jax.random.split(key)
    x = jax.random.normal(kx, (BATCH, INPUT_SIZE), jnp.float32)
    params = init_params(kp, INPUT_SIZE, OUTPUT_SIZE)

    ref = gate_a_reference(x, params)

    # Faithful f32 path (q/k/softmax removal is bit-exact): tight tolerance.
    prep = prepare_gate_a(params)
    out = gate_a_forward(x, prep)
    assert out.shape == (BATCH, OUTPUT_SIZE)
    assert jnp.allclose(out, ref, atol=1e-5, rtol=1e-5), "f32 mismatch vs reference"

    # f32 + host-side Wv folding: only tiny re-association differences.
    out_wv = gate_a_forward(x, prepare_gate_a(params, fuse_wv=True))
    assert jnp.allclose(out_wv, ref, atol=1e-4, rtol=1e-4), "fuse_wv mismatch"

    # Full affine fold: single (bt, D) GEMV per tile, purely HBM-bound on x.
    out_all = gate_a_forward(x, prepare_gate_a(params, fuse_all=True))
    assert out_all.shape == (BATCH, OUTPUT_SIZE)
    assert jnp.allclose(out_all, ref, atol=1e-4, rtol=1e-4), "fuse_all mismatch"

    # bf16 MXU operands (cast in-kernel) with f32 accumulation: looser tolerance.
    out_bf16 = gate_a_forward(x, prepare_gate_a(params, use_bf16=True))
    assert jnp.allclose(out_bf16, ref, atol=2e-1, rtol=2e-1), "bf16 mismatch"

    print("KERNEL_OK")
</pallas_src>

<mosaic_0001>
module attributes {stable_mosaic.version = 11 : i64} {
  func.func @gate_a_kernel(%arg0: i32, %arg1: memref<8x32xf32, #tpu.memory_space<vmem>>, %arg2: memref<32x16xf32, #tpu.memory_space<vmem>>, %arg3: memref<1x16xf32, #tpu.memory_space<vmem>>, %arg4: memref<16x16xf32, #tpu.memory_space<vmem>>, %arg5: memref<1x16xf32, #tpu.memory_space<vmem>>, %arg6: memref<1x16xf32, #tpu.memory_space<vmem>>, %arg7: memref<1x1xf32, #tpu.memory_space<vmem>>, %arg8: memref<8x1xf32, #tpu.memory_space<vmem>>) attributes {dimension_semantics = [#tpu.dimension_semantics<parallel>], iteration_bounds = array<i64: 1>, scalar_prefetch = 0 : i64, scratch_operands = 0 : i64, tpu.core_type = #tpu.core_type<tc>, window_params = [{transform_indices = @transform_0, window_bounds = array<i64: 8, 32>}, {pipeline_mode = #tpu.pipeline_mode<synchronous>, transform_indices = @transform_1, window_bounds = array<i64: 32, 16>}, {pipeline_mode = #tpu.pipeline_mode<synchronous>, transform_indices = @transform_2, window_bounds = array<i64: 1, 16>}, {pipeline_mode = #tpu.pipeline_mode<synchronous>, transform_indices = @transform_3, window_bounds = array<i64: 16, 16>}, {pipeline_mode = #tpu.pipeline_mode<synchronous>, transform_indices = @transform_4, window_bounds = array<i64: 1, 16>}, {pipeline_mode = #tpu.pipeline_mode<synchronous>, transform_indices = @transform_5, window_bounds = array<i64: 1, 16>}, {pipeline_mode = #tpu.pipeline_mode<synchronous>, transform_indices = @transform_6, window_bounds = array<i64: 1, 1>}, {transform_indices = @transform_7, window_bounds = array<i64: 8, 1>}]} {
    %c0 = arith.constant 0 : index
    %c0_0 = arith.constant 0 : index
    %0 = vector.load %arg1[%c0, %c0_0] : memref<8x32xf32, #tpu.memory_space<vmem>>, vector<8x32xf32>
    %c0_1 = arith.constant 0 : index
    %c0_2 = arith.constant 0 : index
    %1 = vector.load %arg2[%c0_1, %c0_2] : memref<32x16xf32, #tpu.memory_space<vmem>>, vector<32x16xf32>
    %cst = arith.constant dense<0.000000e+00> : vector<8x16xf32>
    %2 = tpu.matmul %0, %1, %cst {dimension_numbers = #tpu.dot_dimension_numbers<[1], [0], [0], [1], [0, 0, 1, 1], [], []>} : vector<8x32xf32>, vector<32x16xf32>, vector<8x16xf32> -> vector<8x16xf32>
    %c0_3 = arith.constant 0 : index
    %c0_4 = arith.constant 0 : index
    %3 = vector.load %arg3[%c0_3, %c0_4] : memref<1x16xf32, #tpu.memory_space<vmem>>, vector<1x16xf32>
    %4 = vector.broadcast %3 : vector<1x16xf32> to vector<8x16xf32>
    %5 = arith.addf %2, %4 : vector<8x16xf32>
    %c0_5 = arith.constant 0 : index
    %c0_6 = arith.constant 0 : index
    %6 = vector.load %arg4[%c0_5, %c0_6] : memref<16x16xf32, #tpu.memory_space<vmem>>, vector<16x16xf32>
    %cst_7 = arith.constant dense<0.000000e+00> : vector<8x16xf32>
    %7 = tpu.matmul %5, %6, %cst_7 {dimension_numbers = #tpu.dot_dimension_numbers<[1], [0], [0], [1], [0, 0, 1, 1], [], []>} : vector<8x16xf32>, vector<16x16xf32>, vector<8x16xf32> -> vector<8x16xf32>
    %c0_8 = arith.constant 0 : index
    %c0_9 = arith.constant 0 : index
    %8 = vector.load %arg5[%c0_8, %c0_9] : memref<1x16xf32, #tpu.memory_space<vmem>>, vector<1x16xf32>
    %9 = vector.broadcast %8 : vector<1x16xf32> to vector<8x16xf32>
    %10 = arith.addf %7, %9 : vector<8x16xf32>
    %c0_10 = arith.constant 0 : index
    %c0_11 = arith.constant 0 : index
    %11 = vector.load %arg6[%c0_10, %c0_11] : memref<1x16xf32, #tpu.memory_space<vmem>>, vector<1x16xf32>
    %12 = vector.broadcast %11 : vector<1x16xf32> to vector<8x16xf32>
    %13 = arith.mulf %10, %12 : vector<8x16xf32>
    %cst_12 = arith.constant dense<0.000000e+00> : vector<8xf32>
    %14 = vector.multi_reduction <add>, %13, %cst_12 [1] : vector<8x16xf32> to vector<8xf32>
    %15 = vector.shape_cast %14 : vector<8xf32> to vector<8x1xf32>
    %c0_13 = arith.constant 0 : index
    %c0_14 = arith.constant 0 : index
    %16 = vector.load %arg7[%c0_13, %c0_14] : memref<1x1xf32, #tpu.memory_space<vmem>>, vector<1x1xf32>
    %17 = vector.broadcast %16 : vector<1x1xf32> to vector<8x1xf32>
    %18 = arith.addf %15, %17 : vector<8x1xf32>
    %c0_15 = arith.constant 0 : index
    %c0_16 = arith.constant 0 : index
    %19 = vector.load %arg8[%c0_15, %c0_16] : memref<8x1xf32, #tpu.memory_space<vmem>>, vector<8x1xf32>
    tpu.vector_store %arg8[%c0_15, %c0_16], %18 {strides = array<i32>} : memref<8x1xf32, #tpu.memory_space<vmem>>, vector<8x1xf32>,
    return
  }
  func.func @transform_0(%arg0: i32) -> (i32, i32) {
    %c0_i32 = arith.constant 0 : i32
    %c0_i32_0 = arith.constant 0 : i32
    return %arg0, %c0_i32 : i32, i32
  }
  func.func @transform_1(%arg0: i32) -> (i32, i32) {
    %c0_i32 = arith.constant 0 : i32
    %c0_i32_0 = arith.constant 0 : i32
    %c0_i32_1 = arith.constant 0 : i32
    return %c0_i32, %c0_i32_0 : i32, i32
  }
  func.func @transform_2(%arg0: i32) -> (i32, i32) {
    %c0_i32 = arith.constant 0 : i32
    %c0_i32_0 = arith.constant 0 : i32
    %c0_i32_1 = arith.constant 0 : i32
    return %c0_i32, %c0_i32_0 : i32, i32
  }
  func.func @transform_3(%arg0: i32) -> (i32, i32) {
    %c0_i32 = arith.constant 0 : i32
    %c0_i32_0 = arith.constant 0 : i32
    %c0_i32_1 = arith.constant 0 : i32
    return %c0_i32, %c0_i32_0 : i32, i32
  }
  func.func @transform_4(%arg0: i32) -> (i32, i32) {
    %c0_i32 = arith.constant 0 : i32
    %c0_i32_0 = arith.constant 0 : i32
    %c0_i32_1 = arith.constant 0 : i32
    return %c0_i32, %c0_i32_0 : i32, i32
  }
  func.func @transform_5(%arg0: i32) -> (i32, i32) {
    %c0_i32 = arith.constant 0 : i32
    %c0_i32_0 = arith.constant 0 : i32
    %c0_i32_1 = arith.constant 0 : i32
    return %c0_i32, %c0_i32_0 : i32, i32
  }
  func.func @transform_6(%arg0: i32) -> (i32, i32) {
    %c0_i32 = arith.constant 0 : i32
    %c0_i32_0 = arith.constant 0 : i32
    %c0_i32_1 = arith.constant 0 : i32
    return %c0_i32, %c0_i32_0 : i32, i32
  }
  func.func @transform_7(%arg0: i32) -> (i32, i32) {
    %c0_i32 = arith.constant 0 : i32
    %c0_i32_0 = arith.constant 0 : i32
    return %arg0, %c0_i32 : i32, i32
  }
}

module attributes {stable_mosaic.version = 11 : i64} {
  func.func @gate_a_kernel(%arg0: i32, %arg1: memref<8x32xf32, #tpu.memory_space<vmem>>, %arg2: memref<32x16xf32, #tpu.memory_space<vmem>>, %arg3: memref<1x16xf32, #tpu.memory_space<vmem>>, %arg4: memref<16x16xf32, #tpu.memory_space<vmem>>, %arg5: memref<1x16xf32, #tpu.memory_space<vmem>>, %arg6: memref<1x16xf32, #tpu.memory_space<vmem>>, %arg7: memref<1x1xf32, #tpu.memory_space<vmem>>, %arg8: memref<8x1xf32, #tpu.memory_space<vmem>>) attributes {dimension_semantics = [#tpu.dimension_semantics<parallel>], iteration_bounds = array<i64: 1>, scalar_prefetch = 0 : i64, scratch_operands = 0 : i64, tpu.core_type = #tpu.core_type<tc>, window_params = [{transform_indices = @transform_0, window_bounds = array<i64: 8, 32>}, {pipeline_mode = #tpu.pipeline_mode<synchronous>, transform_indices = @transform_1, window_bounds = array<i64: 32, 16>}, {pipeline_mode = #tpu.pipeline_mode<synchronous>, transform_indices = @transform_2, window_bounds = array<i64: 1, 16>}, {pipeline_mode = #tpu.pipeline_mode<synchronous>, transform_indices = @transform_3, window_bounds = array<i64: 16, 16>}, {pipeline_mode = #tpu.pipeline_mode<synchronous>, transform_indices = @transform_4, window_bounds = array<i64: 1, 16>}, {pipeline_mode = #tpu.pipeline_mode<synchronous>, transform_indices = @transform_5, window_bounds = array<i64: 1, 16>}, {pipeline_mode = #tpu.pipeline_mode<synchronous>, transform_indices = @transform_6, window_bounds = array<i64: 1, 1>}, {transform_indices = @transform_7, window_bounds = array<i64: 8, 1>}]} {
    %c0 = arith.constant 0 : index
    %c0_0 = arith.constant 0 : index
    %0 = vector.load %arg1[%c0, %c0_0] : memref<8x32xf32, #tpu.memory_space<vmem>>, vector<8x32xf32>
    %c0_1 = arith.constant 0 : index
    %c0_2 = arith.constant 0 : index
    %1 = vector.load %arg2[%c0_1, %c0_2] : memref<32x16xf32, #tpu.memory_space<vmem>>, vector<32x16xf32>
    %cst = arith.constant dense<0.000000e+00> : vector<8x16xf32>
    %2 = tpu.matmul %0, %1, %cst {dimension_numbers = #tpu.dot_dimension_numbers<[1], [0], [0], [1], [0, 0, 1, 1], [], []>} : vector<8x32xf32>, vector<32x16xf32>, vector<8x16xf32> -> vector<8x16xf32>
    %c0_3 = arith.constant 0 : index
    %c0_4 = arith.constant 0 : index
    %3 = vector.load %arg3[%c0_3, %c0_4] : memref<1x16xf32, #tpu.memory_space<vmem>>, vector<1x16xf32>
    %4 = vector.broadcast %3 : vector<1x16xf32> to vector<8x16xf32>
    %5 = arith.addf %2, %4 : vector<8x16xf32>
    %c0_5 = arith.constant 0 : index
    %c0_6 = arith.constant 0 : index
    %6 = vector.load %arg4[%c0_5, %c0_6] : memref<16x16xf32, #tpu.memory_space<vmem>>, vector<16x16xf32>
    %cst_7 = arith.constant dense<0.000000e+00> : vector<8x16xf32>
    %7 = tpu.matmul %5, %6, %cst_7 {dimension_numbers = #tpu.dot_dimension_numbers<[1], [0], [0], [1], [0, 0, 1, 1], [], []>} : vector<8x16xf32>, vector<16x16xf32>, vector<8x16xf32> -> vector<8x16xf32>
    %c0_8 = arith.constant 0 : index
    %c0_9 = arith.constant 0 : index
    %8 = vector.load %arg5[%c0_8, %c0_9] : memref<1x16xf32, #tpu.memory_space<vmem>>, vector<1x16xf32>
    %9 = vector.broadcast %8 : vector<1x16xf32> to vector<8x16xf32>
    %10 = arith.addf %7, %9 : vector<8x16xf32>
    %c0_10 = arith.constant 0 : index
    %c0_11 = arith.constant 0 : index
    %11 = vector.load %arg6[%c0_10, %c0_11] : memref<1x16xf32, #tpu.memory_space<vmem>>, vector<1x16xf32>
    %12 = vector.broadcast %11 : vector<1x16xf32> to vector<8x16xf32>
    %13 = arith.mulf %10, %12 : vector<8x16xf32>
    %cst_12 = arith.constant dense<0.000000e+00> : vector<8xf32>
    %14 = vector.multi_reduction <add>, %13, %cst_12 [1] : vector<8x16xf32> to vector<8xf32>
    %15 = vector.shape_cast %14 : vector<8xf32> to vector<8x1xf32>
    %c0_13 = arith.constant 0 : index
    %c0_14 = arith.constant 0 : index
    %16 = vector.load %arg7[%c0_13, %c0_14] : memref<1x1xf32, #tpu.memory_space<vmem>>, vector<1x1xf32>
    %17 = vector.broadcast %16 : vector<1x1xf32> to vector<8x1xf32>
    %18 = arith.addf %15, %17 : vector<8x1xf32>
    %c0_15 = arith.constant 0 : index
    %c0_16 = arith.constant 0 : index
    %19 = vector.load %arg8[%c0_15, %c0_16] : memref<8x1xf32, #tpu.memory_space<vmem>>, vector<8x1xf32>
    tpu.vector_store %arg8[%c0_15, %c0_16], %18 {strides = array<i32>} : memref<8x1xf32, #tpu.memory_space<vmem>>, vector<8x1xf32>,
    return
  }
  func.func @transform_0(%arg0: i32) -> (i32, i32) {
    %c0_i32 = arith.constant 0 : i32
    %c0_i32_0 = arith.constant 0 : i32
    return %arg0, %c0_i32 : i32, i32
  }
  func.func @transform_1(%arg0: i32) -> (i32, i32) {
    %c0_i32 = arith.constant 0 : i32
    %c0_i32_0 = arith.constant 0 : i32
    %c0_i32_1 = arith.constant 0 : i32
    return %c0_i32, %c0_i32_0 : i32, i32
  }
  func.func @transform_2(%arg0: i32) -> (i32, i32) {
    %c0_i32 = arith.constant 0 : i32
    %c0_i32_0 = arith.constant 0 : i32
    %c0_i32_1 = arith.constant 0 : i32
    return %c0_i32, %c0_i32_0 : i32, i32
  }
  func.func @transform_3(%arg0: i32) -> (i32, i32) {
    %c0_i32 = arith.constant 0 : i32
    %c0_i32_0 = arith.constant 0 : i32
    %c0_i32_1 = arith.constant 0 : i32
    return %c0_i32, %c0_i32_0 : i32, i32
  }
  func.func @transform_4(%arg0: i32) -> (i32, i32) {
    %c0_i32 = arith.constant 0 : i32
    %c0_i32_0 = arith.constant 0 : i32
    %c0_i32_1 = arith.constant 0 : i32
    return %c0_i32, %c0_i32_0 : i32, i32
  }
  func.func @transform_5(%arg0: i32) -> (i32, i32) {
    %c0_i32 = arith.constant 0 : i32
    %c0_i32_0 = arith.constant 0 : i32
    %c0_i32_1 = arith.constant 0 : i32
    return %c0_i32, %c0_i32_0 : i32, i32
  }
  func.func @transform_6(%arg0: i32) -> (i32, i32) {
    %c0_i32 = arith.constant 0 : i32
    %c0_i32_0 = arith.constant 0 : i32
    %c0_i32_1 = arith.constant 0 : i32
    return %c0_i32, %c0_i32_0 : i32, i32
  }
  func.func @transform_7(%arg0: i32) -> (i32, i32) {
    %c0_i32 = arith.constant 0 : i32
    %c0_i32_0 = arith.constant 0 : i32
    return %arg0, %c0_i32 : i32, i32
  }
}

</mosaic_0001>

<llo_original>
// kernel: tpu_custom_call.1
$region0: #{tpu_custom_call.1}
  #allocation0 [shape = 'u32[]', space=smem, size = 0x4, offset = 0x4, fixed_abs, tag = 'smem constant byte address 0x4 - core index']
  #allocation1 [shape = 'u32[72,128]{1,0:T(1,128)}', space=vmem, size = 0x9000, scoped, tag = 'internal scratch']
  #allocation2 [shape = 'f32[1,1]{1,0:T(1,128)S(1)}', space=vmem, size = 0x200, scoped, tag = 'scoped memory for tpu_custom_call.1']
  %s0 = inlined_call_operand.vmem [shape: f32[8,32], index: 0, kind: input, shape index: {}]
  %s1 = inlined_call_operand.vmem [shape: f32[32,16], index: 1, kind: input, shape index: {}]
  %s2 = inlined_call_operand.vmem [shape: f32[1,16], index: 2, kind: input, shape index: {}]
  %s3 = inlined_call_operand.vmem [shape: f32[16,16], index: 3, kind: input, shape index: {}]
  %s4 = inlined_call_operand.vmem [shape: f32[1,16], index: 4, kind: input, shape index: {}]
  %s5 = inlined_call_operand.vmem [shape: f32[1,16], index: 5, kind: input, shape index: {}]
  %s6 = inlined_call_operand.<no memory space> [shape: f32[1,1], index: 6, kind: input, shape index: {}]
  %s7 = inlined_call_operand.vmem [shape: f32[8,1], index: 7, kind: output, shape index: {}]
  %s8 = sld [smem:[#allocation0]]
  $region38: #{tpu_custom_call.1} parent=0
    _
  %s10 = ssub.s32 1, %s8
  %s11 = scalar_select 0, %s10, %s8
  %v12 = vstv %s6
  %13 = vst [vmem:[#allocation2] sm:$0x1] %v12
  // Predicated region
  $region2: #{tpu_custom_call.1} parent=0 // pred_check
    _
  $region3: #{tpu_custom_call.1} parent=0 // pred_check_branch
    %15 = sbr.rel (0) target = $region5
  $region4: #{tpu_custom_call.1} parent=0 // pred_region
    _
  $region5: #{tpu_custom_call.1} parent=0 // pred_fallthru
    _
  // Predicated region
  $region6: #{tpu_custom_call.1} parent=0 // pred_check
    _
  $region7: #{tpu_custom_call.1} parent=0 // pred_check_branch
    %17 = sbr.rel (0) target = $region9
  $region8: #{tpu_custom_call.1} parent=0 // pred_region
    _
  $region9: #{tpu_custom_call.1} parent=0 // pred_fallthru
    _
  // Predicated region
  $region10: #{tpu_custom_call.1} parent=0 // pred_check
    _
  $region11: #{tpu_custom_call.1} parent=0 // pred_check_branch
    %19 = sbr.rel (0) target = $region13
  $region12: #{tpu_custom_call.1} parent=0 // pred_region
    _
  $region13: #{tpu_custom_call.1} parent=0 // pred_fallthru
    _
  // Predicated region
  $region14: #{tpu_custom_call.1} parent=0 // pred_check
    _
  $region15: #{tpu_custom_call.1} parent=0 // pred_check_branch
    %21 = sbr.rel (0) target = $region17
  $region16: #{tpu_custom_call.1} parent=0 // pred_region
    _
  $region17: #{tpu_custom_call.1} parent=0 // pred_fallthru
    _
  // Predicated region
  $region18: #{tpu_custom_call.1} parent=0 // pred_check
    _
  $region19: #{tpu_custom_call.1} parent=0 // pred_check_branch
    %23 = sbr.rel (0) target = $region21
  $region20: #{tpu_custom_call.1} parent=0 // pred_region
    _
  $region21: #{tpu_custom_call.1} parent=0 // pred_fallthru
    _
  // Predicated region
  $region22: #{tpu_custom_call.1} parent=0 // pred_check
    _
  $region23: #{tpu_custom_call.1} parent=0 // pred_check_branch
    %25 = sbr.rel (0) target = $region25
  $region24: #{tpu_custom_call.1} parent=0 // pred_region
    _
  $region25: #{tpu_custom_call.1} parent=0 // pred_fallthru
    _
  // Predicated region
  $region26: #{tpu_custom_call.1} parent=0 // pred_check
    _
  $region27: #{tpu_custom_call.1} parent=0 // pred_check_branch
    %27 = sbr.rel (0) target = $region29
  $region28: #{tpu_custom_call.1} parent=0 // pred_region
    _
  $region29: #{tpu_custom_call.1} parent=0 // pred_fallthru
    _
  %v28 = vld [vmem:[%s0] sm:$0xff]
  %v29 = vld [vmem:[%s1] sm:$0xff]
  %v30 = vld [vmem:[%s1 + $0x8] sm:$0xff]
  %v31 = vld [vmem:[%s1 + $0x10] sm:$0xff]
  %v32 = vld [vmem:[%s1 + $0x18] sm:$0xff]
  %v33 = vld [vmem:[%s2] sm:$0x1]
  %v35 = vperm.slane %v33, 0
  %vm37 = vcmask 261120
  %v39 = vsel %vm37, %v28, 0
  %41 = vmatpush.msra.mxu0 0.0
  %42 = vmatpush.msra.mxu0 0.0
  %43 = vmatpush.msra.mxu0 0.0
  %44 = vmatpush.msra.mxu0 0.0
  %45 = vmatpush.msra.mxu0 0.0
  %46 = vmatpush.msra.mxu0 0.0
  %47 = vmatpush.msra.mxu0 0.0
  %48 = vmatpush.msra.mxu0 0.0
  %49 = vmatpush.msra.mxu0 0.0
  %50 = vmatpush.msra.mxu0 0.0
  %51 = vmatpush.msra.mxu0 0.0
  %52 = vmatpush.msra.mxu0 0.0
  %53 = vmatpush.msra.mxu0 %v32
  %54 = vmatpush.msra.mxu0 %v31
  %55 = vmatpush.msra.mxu0 %v30
  %56 = vmatpush.msra.mxu0 %v29
  %57 = vmatmul.f32.gmra.mxu0 %v39
  %v58 = vpop.f32.mrf.mxu0
  %v59 = vadd.f32 %v35, %v58
  %60 = vdwg.mxu0
  %v61 = vld [vmem:[%s3] sm:$0xff]
  %v62 = vld [vmem:[%s3 + $0x8] sm:$0xff]
  %v63 = vld [vmem:[%s4] sm:$0x1]
  %v65 = vperm.slane %v63, 0
  %vm67 = vcmask 130048
  %v69 = vsel %vm67, %v59, 0
  %71 = vmatpush.msra.mxu0 0.0
  %72 = vmatpush.msra.mxu0 0.0
  %73 = vmatpush.msra.mxu0 0.0
  %74 = vmatpush.msra.mxu0 0.0
  %75 = vmatpush.msra.mxu0 0.0
  %76 = vmatpush.msra.mxu0 0.0
  %77 = vmatpush.msra.mxu0 0.0
  %78 = vmatpush.msra.mxu0 0.0
  %79 = vmatpush.msra.mxu0 0.0
  %80 = vmatpush.msra.mxu0 0.0
  %81 = vmatpush.msra.mxu0 0.0
  %82 = vmatpush.msra.mxu0 0.0
  %83 = vmatpush.msra.mxu0 0.0
  %84 = vmatpush.msra.mxu0 0.0
  %85 = vmatpush.msra.mxu0 %v62
  %86 = vmatpush.msra.mxu0 %v61
  %87 = vmatmul.f32.gmra.mxu0 %v69
  %v88 = vpop.f32.mrf.mxu0
  %v89 = vadd.f32 %v65, %v88
  %90 = vdwg.mxu0
  %v91 = vld [vmem:[%s5] sm:$0x1]
  %v93 = vperm.slane %v91, 0
  %v95 = vmul.f32 %v89, %v93
  %v96 = vsel %vm67, %v95, 0.0
  %97 = vadd.xlane.f32.xlu0 %v96
  %v98 = vpop.xlane.xlu0 %97
  %v99 = vld [vmem:[#allocation2] sm:$0x1]
  %v101 = vperm.slane %v99, 0
  %v103 = vadd.f32 %v98, %v101
  %vm104 = vcmask 7168
  %105 = vst.msk [vmem:[%s7] sm:$0xff] %vm104, %v103
  // Predicated region
  $region30: #{tpu_custom_call.1} parent=0 // pred_check
    _
  $region31: #{tpu_custom_call.1} parent=0 // pred_check_branch
    %107 = sbr.rel (0) target = $region33
  $region32: #{tpu_custom_call.1} parent=0 // pred_region
    _
  $region33: #{tpu_custom_call.1} parent=0 // pred_fallthru
    _
  // Predicated region
  $region34: #{tpu_custom_call.1} parent=0 // pred_check
    _
  $region35: #{tpu_custom_call.1} parent=0 // pred_check_branch
    %109 = sbr.rel (0) target = $region37
  $region36: #{tpu_custom_call.1} parent=0 // pred_region
    _
  $region37: #{tpu_custom_call.1} parent=0 // pred_fallthru
    _

// kernel: tpu_custom_call.1
$region0: #{tpu_custom_call.1}
  #allocation0 [shape = 'u32[]', space=smem, size = 0x4, offset = 0x4, fixed_abs, tag = 'smem constant byte address 0x4 - core index']
  #allocation1 [shape = 'u32[72,128]{1,0:T(1,128)}', space=vmem, size = 0x9000, scoped, tag = 'internal scratch']
  #allocation2 [shape = 'f32[1,1]{1,0:T(1,128)S(1)}', space=vmem, size = 0x200, scoped, tag = 'scoped memory for tpu_custom_call.1']
  %s0 = inlined_call_operand.vmem [shape: f32[8,32], index: 0, kind: input, shape index: {}]
  %s1 = inlined_call_operand.vmem [shape: f32[32,16], index: 1, kind: input, shape index: {}]
  %s2 = inlined_call_operand.vmem [shape: f32[1,16], index: 2, kind: input, shape index: {}]
  %s3 = inlined_call_operand.vmem [shape: f32[16,16], index: 3, kind: input, shape index: {}]
  %s4 = inlined_call_operand.vmem [shape: f32[1,16], index: 4, kind: input, shape index: {}]
  %s5 = inlined_call_operand.vmem [shape: f32[1,16], index: 5, kind: input, shape index: {}]
  %s6 = inlined_call_operand.<no memory space> [shape: f32[1,1], index: 6, kind: input, shape index: {}]
  %s7 = inlined_call_operand.vmem [shape: f32[8,1], index: 7, kind: output, shape index: {}]
  %s8 = sld [smem:[#allocation0]]
  $region38: #{tpu_custom_call.1} parent=0
    _
  %s10 = ssub.s32 1, %s8
  %s11 = scalar_select 0, %s10, %s8
  %v12 = vstv %s6
  %13 = vst [vmem:[#allocation2] sm:$0x1] %v12
  // Predicated region
  $region2: #{tpu_custom_call.1} parent=0 // pred_check
    _
  $region3: #{tpu_custom_call.1} parent=0 // pred_check_branch
    %15 = sbr.rel (0) target = $region5
  $region4: #{tpu_custom_call.1} parent=0 // pred_region
    _
  $region5: #{tpu_custom_call.1} parent=0 // pred_fallthru
    _
  // Predicated region
  $region6: #{tpu_custom_call.1} parent=0 // pred_check
    _
  $region7: #{tpu_custom_call.1} parent=0 // pred_check_branch
    %17 = sbr.rel (0) target = $region9
  $region8: #{tpu_custom_call.1} parent=0 // pred_region
    _
  $region9: #{tpu_custom_call.1} parent=0 // pred_fallthru
    _
  // Predicated region
  $region10: #{tpu_custom_call.1} parent=0 // pred_check
    _
  $region11: #{tpu_custom_call.1} parent=0 // pred_check_branch
    %19 = sbr.rel (0) target = $region13
  $region12: #{tpu_custom_call.1} parent=0 // pred_region
    _
  $region13: #{tpu_custom_call.1} parent=0 // pred_fallthru
    _
  // Predicated region
  $region14: #{tpu_custom_call.1} parent=0 // pred_check
    _
  $region15: #{tpu_custom_call.1} parent=0 // pred_check_branch
    %21 = sbr.rel (0) target = $region17
  $region16: #{tpu_custom_call.1} parent=0 // pred_region
    _
  $region17: #{tpu_custom_call.1} parent=0 // pred_fallthru
    _
  // Predicated region
  $region18: #{tpu_custom_call.1} parent=0 // pred_check
    _
  $region19: #{tpu_custom_call.1} parent=0 // pred_check_branch
    %23 = sbr.rel (0) target = $region21
  $region20: #{tpu_custom_call.1} parent=0 // pred_region
    _
  $region21: #{tpu_custom_call.1} parent=0 // pred_fallthru
    _
  // Predicated region
  $region22: #{tpu_custom_call.1} parent=0 // pred_check
    _
  $region23: #{tpu_custom_call.1} parent=0 // pred_check_branch
    %25 = sbr.rel (0) target = $region25
  $region24: #{tpu_custom_call.1} parent=0 // pred_region
    _
  $region25: #{tpu_custom_call.1} parent=0 // pred_fallthru
    _
  // Predicated region
  $region26: #{tpu_custom_call.1} parent=0 // pred_check
    _
  $region27: #{tpu_custom_call.1} parent=0 // pred_check_branch
    %27 = sbr.rel (0) target = $region29
  $region28: #{tpu_custom_call.1} parent=0 // pred_region
    _
  $region29: #{tpu_custom_call.1} parent=0 // pred_fallthru
    _
  %v28 = vld [vmem:[%s0] sm:$0xff]
  %v29 = vld [vmem:[%s1] sm:$0xff]
  %v30 = vld [vmem:[%s1 + $0x8] sm:$0xff]
  %v31 = vld [vmem:[%s1 + $0x10] sm:$0xff]
  %v32 = vld [vmem:[%s1 + $0x18] sm:$0xff]
  %v33 = vld [vmem:[%s2] sm:$0x1]
  %v35 = vperm.slane %v33, 0
  %vm37 = vcmask 261120
  %v39 = vsel %vm37, %v28, 0
  %41 = vmatpush.msra.mxu0 0.0
  %42 = vmatpush.msra.mxu0 0.0
  %43 = vmatpush.msra.mxu0 0.0
  %44 = vmatpush.msra.mxu0 0.0
  %45 = vmatpush.msra.mxu0 0.0
  %46 = vmatpush.msra.mxu0 0.0
  %47 = vmatpush.msra.mxu0 0.0
  %48 = vmatpush.msra.mxu0 0.0
  %49 = vmatpush.msra.mxu0 0.0
  %50 = vmatpush.msra.mxu0 0.0
  %51 = vmatpush.msra.mxu0 0.0
  %52 = vmatpush.msra.mxu0 0.0
  %53 = vmatpush.msra.mxu0 %v32
  %54 = vmatpush.msra.mxu0 %v31
  %55 = vmatpush.msra.mxu0 %v30
  %56 = vmatpush.msra.mxu0 %v29
  %57 = vmatmul.f32.gmra.mxu0 %v39
  %v58 = vpop.f32.mrf.mxu0
  %v59 = vadd.f32 %v35, %v58
  %60 = vdwg.mxu0
  %v61 = vld [vmem:[%s3] sm:$0xff]
  %v62 = vld [vmem:[%s3 + $0x8] sm:$0xff]
  %v63 = vld [vmem:[%s4] sm:$0x1]
  %v65 = vperm.slane %v63, 0
  %vm67 = vcmask 130048
  %v69 = vsel %vm67, %v59, 0
  %71 = vmatpush.msra.mxu0 0.0
  %72 = vmatpush.msra.mxu0 0.0
  %73 = vmatpush.msra.mxu0 0.0
  %74 = vmatpush.msra.mxu0 0.0
  %75 = vmatpush.msra.mxu0 0.0
  %76 = vmatpush.msra.mxu0 0.0
  %77 = vmatpush.msra.mxu0 0.0
  %78 = vmatpush.msra.mxu0 0.0
  %79 = vmatpush.msra.mxu0 0.0
  %80 = vmatpush.msra.mxu0 0.0
  %81 = vmatpush.msra.mxu0 0.0
  %82 = vmatpush.msra.mxu0 0.0
  %83 = vmatpush.msra.mxu0 0.0
  %84 = vmatpush.msra.mxu0 0.0
  %85 = vmatpush.msra.mxu0 %v62
  %86 = vmatpush.msra.mxu0 %v61
  %87 = vmatmul.f32.gmra.mxu0 %v69
  %v88 = vpop.f32.mrf.mxu0
  %v89 = vadd.f32 %v65, %v88
  %90 = vdwg.mxu0
  %v91 = vld [vmem:[%s5] sm:$0x1]
  %v93 = vperm.slane %v91, 0
  %v95 = vmul.f32 %v89, %v93
  %v96 = vsel %vm67, %v95, 0.0
  %97 = vadd.xlane.f32.xlu0 %v96
  %v98 = vpop.xlane.xlu0 %97
  %v99 = vld [vmem:[#allocation2] sm:$0x1]
  %v101 = vperm.slane %v99, 0
  %v103 = vadd.f32 %v98, %v101
  %vm104 = vcmask 7168
  %105 = vst.msk [vmem:[%s7] sm:$0xff] %vm104, %v103
  // Predicated region
  $region30: #{tpu_custom_call.1} parent=0 // pred_check
    _
  $region31: #{tpu_custom_call.1} parent=0 // pred_check_branch
    %107 = sbr.rel (0) target = $region33
  $region32: #{tpu_custom_call.1} parent=0 // pred_region
    _
  $region33: #{tpu_custom_call.1} parent=0 // pred_fallthru
    _
  // Predicated region
  $region34: #{tpu_custom_call.1} parent=0 // pred_check
    _
  $region35: #{tpu_custom_call.1} parent=0 // pred_check_branch
    %109 = sbr.rel (0) target = $region37
  $region36: #{tpu_custom_call.1} parent=0 // pred_region
    _
  $region37: #{tpu_custom_call.1} parent=0 // pred_fallthru
    _

</llo_original>
